<compile_context>
chip_gen: v6e
topology: v6e:2x2x1
jax: 0.10.0
libtpu: 0.0.40
codegen_flags: <defaults>
</compile_context>

<pallas_src>
import functools

import jax
import jax.numpy as jnp
from jax.experimental import pallas as pl
from jax.experimental.pallas import tpu as pltpu


def _round_up(x, m):
    return (x + m - 1) // m * m


def _pad2d(a, rows, cols, dtype):
    out = jnp.zeros((rows, cols), dtype)
    return out.at[: a.shape[0], : a.shape[1]].set(a.astype(dtype))


# ----------------------------- Pallas kernel -------------------------------
def tdksnn_kernel(xt_ref, w1_ref, b1_ref, w2_ref, b2_ref, w3_ref, out_ref,
                  *, act_dtype):
    """Transposed MLP: x^T (D_pad, TILE_B) -> out^T (O_pad, TILE_B).

    Batch is on the lane axis, so every load/store is lane-dense; weights are
    in PyTorch (out, in) layout and stay VMEM-resident across grid steps.
    """
    mm_dtype = w1_ref.dtype
    xt = xt_ref[...]                                            # (D_pad, TILE_B)

    # layer1 + tanh: bf16/f32 MXU with f32 accumulation, f32 bias (lane bcast),
    # tanh on the EUP in act_dtype (bf16 on v6e/v7x, f32 on v5e / debug path).
    z1 = jnp.dot(w1_ref[...], xt, preferred_element_type=jnp.float32) + b1_ref[...]
    h1 = jnp.tanh(z1.astype(act_dtype)).astype(mm_dtype)        # (H_pad, TILE_B)

    # layer2 + tanh
    z2 = jnp.dot(w2_ref[...], h1, preferred_element_type=jnp.float32) + b2_ref[...]
    h2 = jnp.tanh(z2.astype(act_dtype)).astype(mm_dtype)        # (H_pad, TILE_B)

    # layer3 (no bias): (O_pad, H_pad) @ (H_pad, TILE_B) -> lane-dense f32 store
    out_ref[...] = jnp.dot(w3_ref[...], h2, preferred_element_type=jnp.float32)


# --------------------------- one-time param prep ----------------------------
def prepare_params(W1, b1, W2, b2, W3, *, compute_dtype=jnp.bfloat16,
                   act_dtype=None):
    """Hoisted weight preparation (do this ONCE, reuse across forward calls).

    W1: (H, D); b1: (H,); W2: (H, H); b2: (H,); W3: (O, H)  -- PyTorch layout.
    """
    if act_dtype is None:
        act_dtype = compute_dtype   # bf16 tanh on v6e/v7x; use f32 on v5e
    H, D = W1.shape
    O = W3.shape[0]

    D_pad = _round_up(D, 16)        # >= bf16 (16,128) packing granule
    H_pad = _round_up(H, 128)       # MXU / lane-friendly hidden width
    O_pad = _round_up(O, 8)         # small sublane pad only (no 128-wide slab)

    return dict(
        w1=_pad2d(W1, H_pad, D_pad, compute_dtype),          # (H_pad, D_pad)
        b1=_pad2d(b1.reshape(-1, 1), H_pad, 1, jnp.float32),  # (H_pad, 1)
        w2=_pad2d(W2, H_pad, H_pad, compute_dtype),           # (H_pad, H_pad)
        b2=_pad2d(b2.reshape(-1, 1), H_pad, 1, jnp.float32),  # (H_pad, 1)
        w3=_pad2d(W3, O_pad, H_pad, compute_dtype),           # (O_pad, H_pad)
        out_dim=O,
        act_dtype=act_dtype,
    )


# ------------------------------- wrapper -----------------------------------
def tdksnn_forward(x, params, *, tile_b=512):
    """x: (B, D) float32 -> (B, O) float32.  Only x prep happens per call."""
    w1, b1, w2, b2, w3 = (params[k] for k in ("w1", "b1", "w2", "b2", "w3"))
    O = params["out_dim"]
    act_dtype = params["act_dtype"]
    compute_dtype = w1.dtype
    H_pad, D_pad = w1.shape
    O_pad = w3.shape[0]

    B, D = x.shape

    # Batch tile: multiple of 128 (lane granule); large tiles amortize the
    # ~0.35us/grid-step overhead. Weights are resident so VMEM stays tiny.
    tile_b = max(128, (int(tile_b) // 128) * 128)
    B_lane = _round_up(B, 128)
    TILE_B = min(tile_b, B_lane)
    B_pad = _round_up(B, TILE_B)
    grid = (B_pad // TILE_B,)

    # Per-call input prep only: transpose + cast + zero-pad the (tiny) batch.
    xt = jnp.zeros((D_pad, B_pad), compute_dtype)
    xt = xt.at[:D, :B].set(x.T.astype(compute_dtype))

    kernel = functools.partial(tdksnn_kernel, act_dtype=act_dtype)

    out_t = pl.pallas_call(
        kernel,
        out_shape=jax.ShapeDtypeStruct((O_pad, B_pad), jnp.float32),
        grid=grid,
        in_specs=[
            pl.BlockSpec((D_pad, TILE_B), lambda i: (0, i)),   # x^T: streamed
            pl.BlockSpec((H_pad, D_pad), lambda i: (0, 0)),    # W1: resident
            pl.BlockSpec((H_pad, 1), lambda i: (0, 0)),        # b1: resident
            pl.BlockSpec((H_pad, H_pad), lambda i: (0, 0)),    # W2: resident
            pl.BlockSpec((H_pad, 1), lambda i: (0, 0)),        # b2: resident
            pl.BlockSpec((O_pad, H_pad), lambda i: (0, 0)),    # W3: resident
        ],
        out_specs=pl.BlockSpec((O_pad, TILE_B), lambda i: (0, i)),  # lane-dense
        compiler_params=pltpu.CompilerParams(
            # independent batch tiles -> megacore sharding on v7x (2 TCs)
            dimension_semantics=("parallel",),
        ),
    )(xt, w1, b1, w2, b2, w3)

    return out_t[:O, :B].T


# --------------------------- parameter helpers -----------------------------
def orthogonal_init(key, out_dim, in_dim):
    """Deterministic orthogonal init for a weight of shape (out_dim, in_dim)."""
    a = jax.random.normal(key, (max(out_dim, in_dim), min(out_dim, in_dim)),
                          dtype=jnp.float32)
    q, r = jnp.linalg.qr(a)
    q = q * jnp.sign(jnp.diagonal(r))[None, :]
    if out_dim < in_dim:
        q = q.T
    return q[:out_dim, :in_dim]


def make_params(key, input_dim, hidden_dim, output_dim):
    k1, k2, k3, k4, k5 = jax.random.split(key, 5)
    W1 = orthogonal_init(k1, hidden_dim, input_dim)            # (H, D)
    W2 = orthogonal_init(k2, hidden_dim, hidden_dim)           # (H, H)
    W3 = orthogonal_init(k3, output_dim, hidden_dim)           # (O, H)
    lim1 = 1.0 / (input_dim ** 0.5)
    lim2 = 1.0 / (hidden_dim ** 0.5)
    b1 = jax.random.uniform(k4, (hidden_dim,), jnp.float32, -lim1, lim1)
    b2 = jax.random.uniform(k5, (hidden_dim,), jnp.float32, -lim2, lim2)
    return W1, b1, W2, b2, W3


# ------------------------------ references ---------------------------------
def reference_forward_f32(x, W1, b1, W2, b2, W3):
    dot = functools.partial(jnp.dot, precision=jax.lax.Precision.HIGHEST)
    h1 = jnp.tanh(dot(x, W1.T) + b1[None, :])
    h2 = jnp.tanh(dot(h1, W2.T) + b2[None, :])
    return dot(h2, W3.T)


def reference_forward_mixed(x, W1, b1, W2, b2, W3,
                            compute_dtype=jnp.bfloat16, act_dtype=jnp.bfloat16):
    """Matches the kernel's low-precision operand / f32-accumulate numerics."""
    w1c, w2c, w3c = (W.T.astype(compute_dtype) for W in (W1, W2, W3))
    z1 = jnp.dot(x.astype(compute_dtype), w1c,
                 preferred_element_type=jnp.float32) + b1[None, :]
    h1 = jnp.tanh(z1.astype(act_dtype)).astype(compute_dtype)
    z2 = jnp.dot(h1, w2c, preferred_element_type=jnp.float32) + b2[None, :]
    h2 = jnp.tanh(z2.astype(act_dtype)).astype(compute_dtype)
    return jnp.dot(h2, w3c, preferred_element_type=jnp.float32)


# --------------------------------- main ------------------------------------
if __name__ == "__main__":
    input_dim, hidden_dim, output_dim = 4, 32, 1
    batch = 1024   # 2 grid steps of TILE_B=512 -> exercises pipelining/megacore

    key = jax.random.PRNGKey(0)
    kx, kp = jax.random.split(key)

    x = jax.random.normal(kx, (batch, input_dim), dtype=jnp.float32)
    W1, b1, W2, b2, W3 = make_params(kp, input_dim, hidden_dim, output_dim)

    # default path: bf16 MXU operands + bf16 tanh (v6e/v7x), f32 accumulation
    params = prepare_params(W1, b1, W2, b2, W3)          # one-time prep
    out = jax.block_until_ready(tdksnn_forward(x, params))
    assert out.shape == (batch, output_dim)
    ref = reference_forward_mixed(x, W1, b1, W2, b2, W3,
                                  compute_dtype=jnp.bfloat16,
                                  act_dtype=jnp.bfloat16)
    assert jnp.allclose(out, ref, atol=2e-2, rtol=2e-2), \
        float(jnp.max(jnp.abs(out - ref)))

    # odd batch exercises batch padding / output slicing
    out_small = jax.block_until_ready(tdksnn_forward(x[:9], params))
    assert out_small.shape == (9, output_dim)
    assert jnp.allclose(out_small, ref[:9], atol=2e-2, rtol=2e-2)

    # debug-only full-f32 path (exact module semantics; also the v5e-safe
    # f32-tanh configuration -- on v5e one would use compute bf16 + act f32)
    params_f32 = prepare_params(W1, b1, W2, b2, W3,
                                compute_dtype=jnp.float32,
                                act_dtype=jnp.float32)
    out_f32 = jax.block_until_ready(tdksnn_forward(x, params_f32))
    ref_f32 = reference_forward_f32(x, W1, b1, W2, b2, W3)
    assert jnp.allclose(out_f32, ref_f32, atol=1e-4, rtol=1e-4), \
        float(jnp.max(jnp.abs(out_f32 - ref_f32)))

    # TODO(synk): time_derivative (torch.autograd.grad of H.sum() + symplectic
    # matmul) is the gradient of this forward; in JAX it comes from
    # jax.grad/custom_vjp on the wrapper, not from an in-kernel op.
    print("KERNEL_OK")
</pallas_src>

<mosaic_0001>
module attributes {stable_mosaic.version = 11 : i64} {
  func.func @tdksnn_kernel(%arg0: i32, %arg1: memref<16x512xbf16, #tpu.memory_space<vmem>>, %arg2: memref<128x16xbf16, #tpu.memory_space<vmem>>, %arg3: memref<128x1xf32, #tpu.memory_space<vmem>>, %arg4: memref<128x128xbf16, #tpu.memory_space<vmem>>, %arg5: memref<128x1xf32, #tpu.memory_space<vmem>>, %arg6: memref<8x128xbf16, #tpu.memory_space<vmem>>, %arg7: memref<8x512xf32, #tpu.memory_space<vmem>>) attributes {dimension_semantics = [#tpu.dimension_semantics<parallel>], iteration_bounds = array<i64: 2>, scalar_prefetch = 0 : i64, scratch_operands = 0 : i64, tpu.core_type = #tpu.core_type<tc>, window_params = [{transform_indices = @transform_0, window_bounds = array<i64: 16, 512>}, {pipeline_mode = #tpu.pipeline_mode<synchronous>, transform_indices = @transform_1, window_bounds = array<i64: 128, 16>}, {pipeline_mode = #tpu.pipeline_mode<synchronous>, transform_indices = @transform_2, window_bounds = array<i64: 128, 1>}, {pipeline_mode = #tpu.pipeline_mode<synchronous>, transform_indices = @transform_3, window_bounds = array<i64: 128, 128>}, {pipeline_mode = #tpu.pipeline_mode<synchronous>, transform_indices = @transform_4, window_bounds = array<i64: 128, 1>}, {pipeline_mode = #tpu.pipeline_mode<synchronous>, transform_indices = @transform_5, window_bounds = array<i64: 8, 128>}, {transform_indices = @transform_6, window_bounds = array<i64: 8, 512>}]} {
    %c0 = arith.constant 0 : index
    %c0_0 = arith.constant 0 : index
    %0 = vector.load %arg1[%c0, %c0_0] : memref<16x512xbf16, #tpu.memory_space<vmem>>, vector<16x512xbf16>
    %c0_1 = arith.constant 0 : index
    %c0_2 = arith.constant 0 : index
    %1 = vector.load %arg2[%c0_1, %c0_2] : memref<128x16xbf16, #tpu.memory_space<vmem>>, vector<128x16xbf16>
    %cst = arith.constant dense<0.000000e+00> : vector<128x512xf32>
    %2 = tpu.matmul %1, %0, %cst {dimension_numbers = #tpu.dot_dimension_numbers<[1], [0], [0], [1], [0, 0, 1, 1], [], []>} : vector<128x16xbf16>, vector<16x512xbf16>, vector<128x512xf32> -> vector<128x512xf32>
    %c0_3 = arith.constant 0 : index
    %c0_4 = arith.constant 0 : index
    %3 = vector.load %arg3[%c0_3, %c0_4] : memref<128x1xf32, #tpu.memory_space<vmem>>, vector<128x1xf32>
    %4 = vector.broadcast %3 : vector<128x1xf32> to vector<128x512xf32>
    %5 = arith.addf %2, %4 : vector<128x512xf32>
    %6 = arith.truncf %5 : vector<128x512xf32> to vector<128x512xbf16>
    %7 = math.tanh %6 : vector<128x512xbf16>
    %c0_5 = arith.constant 0 : index
    %c0_6 = arith.constant 0 : index
    %8 = vector.load %arg4[%c0_5, %c0_6] : memref<128x128xbf16, #tpu.memory_space<vmem>>, vector<128x128xbf16>
    %cst_7 = arith.constant dense<0.000000e+00> : vector<128x512xf32>
    %9 = tpu.matmul %8, %7, %cst_7 {dimension_numbers = #tpu.dot_dimension_numbers<[1], [0], [0], [1], [0, 0, 1, 1], [], []>} : vector<128x128xbf16>, vector<128x512xbf16>, vector<128x512xf32> -> vector<128x512xf32>
    %c0_8 = arith.constant 0 : index
    %c0_9 = arith.constant 0 : index
    %10 = vector.load %arg5[%c0_8, %c0_9] : memref<128x1xf32, #tpu.memory_space<vmem>>, vector<128x1xf32>
    %11 = vector.broadcast %10 : vector<128x1xf32> to vector<128x512xf32>
    %12 = arith.addf %9, %11 : vector<128x512xf32>
    %13 = arith.truncf %12 : vector<128x512xf32> to vector<128x512xbf16>
    %14 = math.tanh %13 : vector<128x512xbf16>
    %c0_10 = arith.constant 0 : index
    %c0_11 = arith.constant 0 : index
    %15 = vector.load %arg6[%c0_10, %c0_11] : memref<8x128xbf16, #tpu.memory_space<vmem>>, vector<8x128xbf16>
    %cst_12 = arith.constant dense<0.000000e+00> : vector<8x512xf32>
    %16 = tpu.matmul %15, %14, %cst_12 {dimension_numbers = #tpu.dot_dimension_numbers<[1], [0], [0], [1], [0, 0, 1, 1], [], []>} : vector<8x128xbf16>, vector<128x512xbf16>, vector<8x512xf32> -> vector<8x512xf32>
    %c0_13 = arith.constant 0 : index
    %c0_14 = arith.constant 0 : index
    %17 = vector.load %arg7[%c0_13, %c0_14] : memref<8x512xf32, #tpu.memory_space<vmem>>, vector<8x512xf32>
    tpu.vector_store %arg7[%c0_13, %c0_14], %16 {strides = array<i32>} : memref<8x512xf32, #tpu.memory_space<vmem>>, vector<8x512xf32>,
    return
  }
  func.func @transform_0(%arg0: i32) -> (i32, i32) {
    %c0_i32 = arith.constant 0 : i32
    %c0_i32_0 = arith.constant 0 : i32
    return %c0_i32, %arg0 : i32, i32
  }
  func.func @transform_1(%arg0: i32) -> (i32, i32) {
    %c0_i32 = arith.constant 0 : i32
    %c0_i32_0 = arith.constant 0 : i32
    %c0_i32_1 = arith.constant 0 : i32
    return %c0_i32, %c0_i32_0 : i32, i32
  }
  func.func @transform_2(%arg0: i32) -> (i32, i32) {
    %c0_i32 = arith.constant 0 : i32
    %c0_i32_0 = arith.constant 0 : i32
    %c0_i32_1 = arith.constant 0 : i32
    return %c0_i32, %c0_i32_0 : i32, i32
  }
  func.func @transform_3(%arg0: i32) -> (i32, i32) {
    %c0_i32 = arith.constant 0 : i32
    %c0_i32_0 = arith.constant 0 : i32
    %c0_i32_1 = arith.constant 0 : i32
    return %c0_i32, %c0_i32_0 : i32, i32
  }
  func.func @transform_4(%arg0: i32) -> (i32, i32) {
    %c0_i32 = arith.constant 0 : i32
    %c0_i32_0 = arith.constant 0 : i32
    %c0_i32_1 = arith.constant 0 : i32
    return %c0_i32, %c0_i32_0 : i32, i32
  }
  func.func @transform_5(%arg0: i32) -> (i32, i32) {
    %c0_i32 = arith.constant 0 : i32
    %c0_i32_0 = arith.constant 0 : i32
    %c0_i32_1 = arith.constant 0 : i32
    return %c0_i32, %c0_i32_0 : i32, i32
  }
  func.func @transform_6(%arg0: i32) -> (i32, i32) {
    %c0_i32 = arith.constant 0 : i32
    %c0_i32_0 = arith.constant 0 : i32
    return %c0_i32, %arg0 : i32, i32
  }
}

</mosaic_0001>

<llo_original>
// kernel: tpu_custom_call.1
$region0: #{tpu_custom_call.1}
  #allocation0 [shape = 'u32[]', space=smem, size = 0x4, offset = 0x4, fixed_abs, tag = 'smem constant byte address 0x4 - core index']
  #allocation1 [shape = 'u32[144,128]{1,0:T(1,128)}', space=vmem, size = 0x12000, scoped, tag = 'internal scratch']
  %s0 = inlined_call_operand.vmem [shape: bf16[16,1024], index: 0, kind: input, shape index: {}]
  %s1 = inlined_call_operand.vmem [shape: bf16[128,16], index: 1, kind: input, shape index: {}]
  %s2 = inlined_call_operand.vmem [shape: f32[128,1], index: 2, kind: input, shape index: {}]
  %s3 = inlined_call_operand.vmem [shape: bf16[128,128], index: 3, kind: input, shape index: {}]
  %s4 = inlined_call_operand.vmem [shape: f32[128,1], index: 4, kind: input, shape index: {}]
  %s5 = inlined_call_operand.vmem [shape: bf16[8,128], index: 5, kind: input, shape index: {}]
  %s6 = inlined_call_operand.hbm [shape: f32[8,1024], index: 6, kind: output, shape index: {}]
  %s7 = sld [smem:[#allocation0]]
  $region80: #{tpu_custom_call.1} parent=0
    _
  %s9 = ssub.s32 1, %s7
  %s10 = scalar_select 0, %s9, %s7
  $region1: #{tpu_custom_call.1} parent=0
    #allocation2 [shape = 'u8[32768]{0}', space=vmem, size = 0x8000, scoped, tag = 'input window, operand 0']
    #allocation3 [shape = 'u8[32768]{0}', space=vmem, size = 0x8000, scoped, tag = 'output window, operand 0']
    #allocation4 [shape = 's32[2]{0}', space=sflag, size = 0x8, scoped, tag = 'scoped memory for tpu_custom_call.1']
    %11 = vsyncpa [#allocation4], 0
    %s12 = scalar_lea.sflag [#allocation4], 1
    %13 = vsyncpa %s12, 0
    loop: start=0, step=1, limit=4
    $region2: #{tpu_custom_call.1} parent=1 // loop_pre_header
      _
    $region3: #{tpu_custom_call.1} parent=1 // loop_header
      %s15 = sphi 0, %s19
      %p16 = scmp.ge.s32.totalorder %s15, 4
      %s25 = sphi 0, %s27
      %s28 = sphi 0, %s25
      %s29 = sphi 0, %s28
      %s45 = sphi 0, %s29
      %s49 = sphi 0, %s49
      %s51 = sphi 0, %s49
      %s52 = sphi 0, %s51
      %s66 = sphi 0, %s52
      %s70 = sphi 0, %s70
      %s72 = sphi 0, %s70
      %s73 = sphi 0, %s72
      %s87 = sphi 0, %s73
      %s91 = sphi 0, %s91
      %s93 = sphi 0, %s91
      %s94 = sphi 0, %s93
      %s108 = sphi 0, %s94
      %s112 = sphi 0, %s112
      %s114 = sphi 0, %s112
      %s115 = sphi 0, %s114
      %s129 = sphi 0, %s115
      %s133 = sphi 0, %s133
      %s135 = sphi 0, %s133
      %s136 = sphi 0, %s135
      %s150 = sphi 0, %s136
      %s156 = sphi 0, %s158
      %s159 = sphi 0, %s156
      %s160 = sphi 0, %s159
      %s176 = sphi 0, %s160
    $region4: #{tpu_custom_call.1} parent=1 // loop_header_branch
      %18 = sbr.rel (%p16) target = $region8
    $region5: #{tpu_custom_call.1} parent=1 // loop_body
      %s20 = ssub.s32 %s15, 1
      %s21 = ssub.s32 %s15, 2
      %s22 = sadd.s32 %s15, 1
      %s23 = ssub.s32 %s15, %s22
      %p24 = scmp.eq.s32.totalorder %s23, 0
      %s26 = sadd.s32 %s25, 1
      %s27 = scalar_select %p24, %s25, %s26
      %p30 = pneg %p24
      %p31 = scmp.eq.s32.totalorder %s15, 1
      %p32 = por %p30, %p31
      %p33 = scmp.ne.s32.totalorder %s25, %s28
      %p34 = scmp.eq.s32.totalorder %s15, 0
      %p35 = por %p33, %p34
      %p36 = scmp.ne.s32.totalorder %s25, %s28
      %p37 = scmp.eq.s32.totalorder %s20, 1
      %p38 = por %p36, %p37
      %p39 = scmp.ne.s32.totalorder %s28, %s29
      %p40 = scmp.eq.s32.totalorder %s20, 0
      %p41 = por %p39, %p40
      %p42 = scmp.ne.s32.totalorder %s28, %s29
      %p43 = scmp.eq.s32.totalorder %s21, 1
      %p44 = por %p42, %p43
      %p46 = scmp.ne.s32.totalorder %s29, %s45
      %p47 = scmp.eq.s32.totalorder %s21, 0
      %p48 = por %p46, %p47
      %s50 = sadd.s32 %s49, 1
      %p53 = scmp.eq.s32.totalorder %s15, 1
      %p54 = scmp.ne.s32.totalorder %s49, %s51
      %p55 = scmp.eq.s32.totalorder %s15, 0
      %p56 = por %p54, %p55
      %p57 = scmp.ne.s32.totalorder %s49, %s51
      %p58 = scmp.eq.s32.totalorder %s20, 1
      %p59 = por %p57, %p58
      %p60 = scmp.ne.s32.totalorder %s51, %s52
      %p61 = scmp.eq.s32.totalorder %s20, 0
      %p62 = por %p60, %p61
      %p63 = scmp.ne.s32.totalorder %s51, %s52
      %p64 = scmp.eq.s32.totalorder %s21, 1
      %p65 = por %p63, %p64
      %p67 = scmp.ne.s32.totalorder %s52, %s66
      %p68 = scmp.eq.s32.totalorder %s21, 0
      %p69 = por %p67, %p68
      %s71 = sadd.s32 %s70, 1
      %p74 = scmp.eq.s32.totalorder %s15, 1
      %p75 = scmp.ne.s32.totalorder %s70, %s72
      %p76 = scmp.eq.s32.totalorder %s15, 0
      %p77 = por %p75, %p76
      %p78 = scmp.ne.s32.totalorder %s70, %s72
      %p79 = scmp.eq.s32.totalorder %s20, 1
      %p80 = por %p78, %p79
      %p81 = scmp.ne.s32.totalorder %s72, %s73
      %p82 = scmp.eq.s32.totalorder %s20, 0
      %p83 = por %p81, %p82
      %p84 = scmp.ne.s32.totalorder %s72, %s73
      %p85 = scmp.eq.s32.totalorder %s21, 1
      %p86 = por %p84, %p85
      %p88 = scmp.ne.s32.totalorder %s73, %s87
      %p89 = scmp.eq.s32.totalorder %s21, 0
      %p90 = por %p88, %p89
      %s92 = sadd.s32 %s91, 1
      %p95 = scmp.eq.s32.totalorder %s15, 1
      %p96 = scmp.ne.s32.totalorder %s91, %s93
      %p97 = scmp.eq.s32.totalorder %s15, 0
      %p98 = por %p96, %p97
      %p99 = scmp.ne.s32.totalorder %s91, %s93
      %p100 = scmp.eq.s32.totalorder %s20, 1
      %p101 = por %p99, %p100
      %p102 = scmp.ne.s32.totalorder %s93, %s94
      %p103 = scmp.eq.s32.totalorder %s20, 0
      %p104 = por %p102, %p103
      %p105 = scmp.ne.s32.totalorder %s93, %s94
      %p106 = scmp.eq.s32.totalorder %s21, 1
      %p107 = por %p105, %p106
      %p109 = scmp.ne.s32.totalorder %s94, %s108
      %p110 = scmp.eq.s32.totalorder %s21, 0
      %p111 = por %p109, %p110
      %s113 = sadd.s32 %s112, 1
      %p116 = scmp.eq.s32.totalorder %s15, 1
      %p117 = scmp.ne.s32.totalorder %s112, %s114
      %p118 = scmp.eq.s32.totalorder %s15, 0
      %p119 = por %p117, %p118
      %p120 = scmp.ne.s32.totalorder %s112, %s114
      %p121 = scmp.eq.s32.totalorder %s20, 1
      %p122 = por %p120, %p121
      %p123 = scmp.ne.s32.totalorder %s114, %s115
      %p124 = scmp.eq.s32.totalorder %s20, 0
      %p125 = por %p123, %p124
      %p126 = scmp.ne.s32.totalorder %s114, %s115
      %p127 = scmp.eq.s32.totalorder %s21, 1
      %p128 = por %p126, %p127
      %p130 = scmp.ne.s32.totalorder %s115, %s129
      %p131 = scmp.eq.s32.totalorder %s21, 0
      %p132 = por %p130, %p131
      %s134 = sadd.s32 %s133, 1
      %p137 = scmp.eq.s32.totalorder %s15, 1
      %p138 = scmp.ne.s32.totalorder %s133, %s135
      %p139 = scmp.eq.s32.totalorder %s15, 0
      %p140 = por %p138, %p139
      %p141 = scmp.ne.s32.totalorder %s133, %s135
      %p142 = scmp.eq.s32.totalorder %s20, 1
      %p143 = por %p141, %p142
      %p144 = scmp.ne.s32.totalorder %s135, %s136
      %p145 = scmp.eq.s32.totalorder %s20, 0
      %p146 = por %p144, %p145
      %p147 = scmp.ne.s32.totalorder %s135, %s136
      %p148 = scmp.eq.s32.totalorder %s21, 1
      %p149 = por %p147, %p148
      %p151 = scmp.ne.s32.totalorder %s136, %s150
      %p152 = scmp.eq.s32.totalorder %s21, 0
      %p153 = por %p151, %p152
      %s154 = ssub.s32 %s15, %s22
      %p155 = scmp.eq.s32.totalorder %s154, 0
      %s157 = sadd.s32 %s156, 1
      %s158 = scalar_select %p155, %s156, %s157
      %p161 = pneg %p155
      %p162 = scmp.eq.s32.totalorder %s15, 1
      %p163 = por %p161, %p162
      %p164 = scmp.ne.s32.totalorder %s156, %s159
      %p165 = scmp.eq.s32.totalorder %s15, 0
      %p166 = por %p164, %p165
      %p167 = scmp.ne.s32.totalorder %s156, %s159
      %p168 = scmp.eq.s32.totalorder %s20, 1
      %p169 = por %p167, %p168
      %p170 = scmp.ne.s32.totalorder %s159, %s160
      %p171 = scmp.eq.s32.totalorder %s20, 0
      %p172 = por %p170, %p171
      %p173 = scmp.ne.s32.totalorder %s159, %s160
      %p174 = scmp.eq.s32.totalorder %s21, 1
      %p175 = por %p173, %p174
      %p177 = scmp.ne.s32.totalorder %s160, %s176
      %p178 = scmp.eq.s32.totalorder %s21, 0
      %p179 = por %p177, %p178
      %p180 = scmp.le.s32.totalorder 1, %s15
      %p181 = scmp.lt.s32.totalorder %s15, 3
      %p182 = pnand %p180, %p181
      %p183 = pneg %p182
      // Predicated region
      $region9: #{tpu_custom_call.1} parent=5 // pred_check
        _
      $region10: #{tpu_custom_call.1} parent=5 // pred_check_branch
        %185 = sbr.rel (%p182) target = $region12
      $region11: #{tpu_custom_call.1} parent=5 // pred_region
        %s186 = ssub.s32 %s15, 1
        // Predicated region
        $region13: #{tpu_custom_call.1} parent=11 // pred_check
          %p187 = pneg %p62
        $region14: #{tpu_custom_call.1} parent=11 // pred_check_branch
          %189 = sbr.rel (%p187) target = $region16
        $region15: #{tpu_custom_call.1} parent=11 // pred_region
          _
        $region16: #{tpu_custom_call.1} parent=11 // pred_fallthru
          _
        // Predicated region
        $region17: #{tpu_custom_call.1} parent=11 // pred_check
          %p190 = pneg %p83
        $region18: #{tpu_custom_call.1} parent=11 // pred_check_branch
          %192 = sbr.rel (%p190) target = $region20
        $region19: #{tpu_custom_call.1} parent=11 // pred_region
          _
        $region20: #{tpu_custom_call.1} parent=11 // pred_fallthru
          _
        // Predicated region
        $region21: #{tpu_custom_call.1} parent=11 // pred_check
          %p193 = pneg %p104
        $region22: #{tpu_custom_call.1} parent=11 // pred_check_branch
          %195 = sbr.rel (%p193) target = $region24
        $region23: #{tpu_custom_call.1} parent=11 // pred_region
          _
        $region24: #{tpu_custom_call.1} parent=11 // pred_fallthru
          _
        // Predicated region
        $region25: #{tpu_custom_call.1} parent=11 // pred_check
          %p196 = pneg %p125
        $region26: #{tpu_custom_call.1} parent=11 // pred_check_branch
          %198 = sbr.rel (%p196) target = $region28
        $region27: #{tpu_custom_call.1} parent=11 // pred_region
          _
        $region28: #{tpu_custom_call.1} parent=11 // pred_fallthru
          _
        // Predicated region
        $region29: #{tpu_custom_call.1} parent=11 // pred_check
          %p199 = pneg %p146
        $region30: #{tpu_custom_call.1} parent=11 // pred_check_branch
          %201 = sbr.rel (%p199) target = $region32
        $region31: #{tpu_custom_call.1} parent=11 // pred_region
          _
        $region32: #{tpu_custom_call.1} parent=11 // pred_fallthru
          _
      $region12: #{tpu_custom_call.1} parent=5 // pred_fallthru
        _
      %p202 = scmp.lt.s32.totalorder %s15, 2
      // Predicated region
      $region33: #{tpu_custom_call.1} parent=5 // pred_check
        %p203 = pneg %p202
      $region34: #{tpu_custom_call.1} parent=5 // pred_check_branch
        %205 = sbr.rel (%p203) target = $region36
      $region35: #{tpu_custom_call.1} parent=5 // pred_region
        // Predicated region
        $region37: #{tpu_custom_call.1} parent=35 // pred_check
          %p206 = pneg %p35
        $region38: #{tpu_custom_call.1} parent=35 // pred_check_branch
          %208 = sbr.rel (%p206) target = $region40
        $region39: #{tpu_custom_call.1} parent=35 // pred_region
          %s209 = sand.u32 %s25, 1
          %s210 = sand.u32 %s25, 1
          %s211 = smul.addr %s210, 32
          %s212 = scalar_lea.vmem [#allocation2], %s211
          %s213 = smul.u32 4, %s15
          %s214 = smul.addr %s213, 4
          %s215 = scalar_lea.vmem %s0, %s214
          // Predicated region
          $region41: #{tpu_custom_call.1} parent=39 // pred_check
            _
          $region42: #{tpu_custom_call.1} parent=39 // pred_check_branch
            %217 = sbr.rel (0) target = $region44
          $region43: #{tpu_custom_call.1} parent=39 // pred_region
            // Predicated region
            $region45: #{tpu_custom_call.1} parent=43 // pred_check
              _
            $region46: #{tpu_custom_call.1} parent=43 // pred_check_branch
              %219 = sbr.rel (0) target = $region48
            $region47: #{tpu_custom_call.1} parent=43 // pred_region
              loop: start=0, step=1, limit=1
              $region49: #{tpu_custom_call.1} parent=47 // loop_pre_header
                _
              $region50: #{tpu_custom_call.1} parent=47 // loop_header
                %s221 = sphi 0, %s225
                %p222 = scmp.ge.s32.totalorder %s221, 1
                %s226 = sphi %s215, %s215
                %s227 = sphi %s212, %s212
              $region51: #{tpu_custom_call.1} parent=47 // loop_header_branch
                %224 = sbr.rel (%p222) target = $region55
              $region52: #{tpu_custom_call.1} parent=47 // loop_body
                %v228 = vld [vmem:[%s226] sm:$0xff]
                %229 = vst [vmem:[%s227] sm:$0xff] %v228
                %v230 = vld [vmem:[%s226 + $0x8] sm:$0xff]
                %231 = vst [vmem:[%s227 + $0x8] sm:$0xff] %v230
                %v232 = vld [vmem:[%s226 + $0x20] sm:$0xff]
                %233 = vst [vmem:[%s227 + $0x10] sm:$0xff] %v232
                %v234 = vld [vmem:[%s226 + $0x28] sm:$0xff]
                %235 = vst [vmem:[%s227 + $0x18] sm:$0xff] %v234
              $region53: #{tpu_custom_call.1} parent=47 // loop_footer
                %s225 = sadd.s32 1, %s221
              $region54: #{tpu_custom_call.1} parent=47 // loop_footer_branch
                %220 = sbr.rel target = $region50
              $region55: #{tpu_custom_call.1} parent=47 // loop_exit
                _
            $region48: #{tpu_custom_call.1} parent=43 // pred_fallthru
              _
            // Predicated region
            $region56: #{tpu_custom_call.1} parent=43 // pred_check
              _
            $region57: #{tpu_custom_call.1} parent=43 // pred_check_branch
              %237 = sbr.rel target = $region59
            $region58: #{tpu_custom_call.1} parent=43 // pred_region
              _
            $region59: #{tpu_custom_call.1} parent=43 // pred_fallthru
              _
          $region44: #{tpu_custom_call.1} parent=39 // pred_fallthru
            _
          %238 = vnop
        $region40: #{tpu_custom_call.1} parent=35 // pred_fallthru
          _
      $region36: #{tpu_custom_call.1} parent=5 // pred_fallthru
        _
      %p239 = scmp.le.s32.totalorder 1, %s15
      %p240 = scmp.lt.s32.totalorder %s15, 3
      %p241 = pnand %p239, %p240
      %p242 = pneg %p241
      // Predicated region
      $region60: #{tpu_custom_call.1} parent=5 // pred_check
        _
      $region61: #{tpu_custom_call.1} parent=5 // pred_check_branch
        %244 = sbr.rel (%p241) target = $region63
      $region62: #{tpu_custom_call.1} parent=5 // pred_region
        %s245 = ssub.s32 %s15, 1
        %s246 = sand.u32 %s28, 1
        %s247 = sand.u32 %s28, 1
        %s248 = smul.addr %s247, 32
        %s249 = scalar_lea.vmem [#allocation2], %s248
        // Predicated region
        $region64: #{tpu_custom_call.1} parent=62 // pred_check
          %p250 = pneg %p41
        $region65: #{tpu_custom_call.1} parent=62 // pred_check_branch
          %252 = sbr.rel (%p250) target = $region67
        $region66: #{tpu_custom_call.1} parent=62 // pred_region
          _
        $region67: #{tpu_custom_call.1} parent=62 // pred_fallthru
          _
        %s253 = sand.u32 %s28, 1
        %s254 = sand.u32 %s28, 1
        %s255 = smul.addr %s254, 32
        %s256 = scalar_lea.vmem [#allocation2], %s255
        %p257 = pneg %p41
        %p258 = pneg %p38
        %p259 = pneg %p62
        %p260 = pneg %p59
        %p261 = pneg %p83
        %p262 = pneg %p80
        %p263 = pneg %p104
        %p264 = pneg %p101
        %p265 = pneg %p125
        %p266 = pneg %p122
        %p267 = pneg %p146
        %p268 = pneg %p143
        %p269 = pneg %p172
        %p270 = pneg %p169
        %s271 = sand.u32 %s159, 1
        %s272 = scalar_lea.sflag [#allocation4], %s271
        %s273 = sand.u32 %s159, 1
        %s274 = smul.addr %s273, 32
        %s275 = scalar_lea.vmem [#allocation3], %s274
        %s276 = smul.u32 4, %s20
        %s277 = smul.u32 4, %s20
        %v279 = vld [vmem:[%s249] sm:$0xff]
        %v280 = vld [vmem:[%s249 + $0x8] sm:$0xff]
        %v281 = vld [vmem:[%s249 + $0x10] sm:$0xff]
        %v282 = vld [vmem:[%s249 + $0x18] sm:$0xff]
        %v283 = vld [vmem:[%s1] sm:$0xf]
        %v284 = vld [vmem:[%s1 + $0x4] sm:$0xf]
        %v285 = vld [vmem:[%s1 + $0x8] sm:$0xf]
        %v286 = vld [vmem:[%s1 + $0xc] sm:$0xf]
        %v287 = vld [vmem:[%s1 + $0x10] sm:$0xf]
        %v288 = vld [vmem:[%s1 + $0x14] sm:$0xf]
        %v289 = vld [vmem:[%s1 + $0x18] sm:$0xf]
        %v290 = vld [vmem:[%s1 + $0x1c] sm:$0xf]
        %v291 = vld [vmem:[%s1 + $0x20] sm:$0xf]
        %v292 = vld [vmem:[%s1 + $0x24] sm:$0xf]
        %v293 = vld [vmem:[%s1 + $0x28] sm:$0xf]
        %v294 = vld [vmem:[%s1 + $0x2c] sm:$0xf]
        %v295 = vld [vmem:[%s1 + $0x30] sm:$0xf]
        %v296 = vld [vmem:[%s1 + $0x34] sm:$0xf]
        %v297 = vld [vmem:[%s1 + $0x38] sm:$0xf]
        %v298 = vld [vmem:[%s1 + $0x3c] sm:$0xf]
        %v299 = vld [vmem:[%s2] sm:$0xff]
        %v300 = vld [vmem:[%s2 + $0x8] sm:$0xff]
        %v301 = vld [vmem:[%s2 + $0x10] sm:$0xff]
        %v302 = vld [vmem:[%s2 + $0x18] sm:$0xff]
        %v303 = vld [vmem:[%s2 + $0x20] sm:$0xff]
        %v304 = vld [vmem:[%s2 + $0x28] sm:$0xff]
        %v305 = vld [vmem:[%s2 + $0x30] sm:$0xff]
        %v306 = vld [vmem:[%s2 + $0x38] sm:$0xff]
        %v307 = vld [vmem:[%s2 + $0x40] sm:$0xff]
        %v308 = vld [vmem:[%s2 + $0x48] sm:$0xff]
        %v309 = vld [vmem:[%s2 + $0x50] sm:$0xff]
        %v310 = vld [vmem:[%s2 + $0x58] sm:$0xff]
        %v311 = vld [vmem:[%s2 + $0x60] sm:$0xff]
        %v312 = vld [vmem:[%s2 + $0x68] sm:$0xff]
        %v313 = vld [vmem:[%s2 + $0x70] sm:$0xff]
        %v314 = vld [vmem:[%s2 + $0x78] sm:$0xff]
        %316 = vset.pattern.permute.xlu0 0
        %317 = vperm.xlu0 %316, %v299
        %v318 = vpop.permute.xlu0 %317
        %321 = vset.pattern.permute.xlu0 0
        %322 = vperm.xlu0 %321, %v300
        %v323 = vpop.permute.xlu0 %322
        %326 = vset.pattern.permute.xlu0 0
        %327 = vperm.xlu0 %326, %v301
        %v328 = vpop.permute.xlu0 %327
        %331 = vset.pattern.permute.xlu0 0
        %332 = vperm.xlu0 %331, %v302
        %v333 = vpop.permute.xlu0 %332
        %336 = vset.pattern.permute.xlu0 0
        %337 = vperm.xlu0 %336, %v303
        %v338 = vpop.permute.xlu0 %337
        %341 = vset.pattern.permute.xlu0 0
        %342 = vperm.xlu0 %341, %v304
        %v343 = vpop.permute.xlu0 %342
        %346 = vset.pattern.permute.xlu0 0
        %347 = vperm.xlu0 %346, %v305
        %v348 = vpop.permute.xlu0 %347
        %351 = vset.pattern.permute.xlu0 0
        %352 = vperm.xlu0 %351, %v306
        %v353 = vpop.permute.xlu0 %352
        %356 = vset.pattern.permute.xlu0 0
        %357 = vperm.xlu0 %356, %v307
        %v358 = vpop.permute.xlu0 %357
        %361 = vset.pattern.permute.xlu0 0
        %362 = vperm.xlu0 %361, %v308
        %v363 = vpop.permute.xlu0 %362
        %366 = vset.pattern.permute.xlu0 0
        %367 = vperm.xlu0 %366, %v309
        %v368 = vpop.permute.xlu0 %367
        %371 = vset.pattern.permute.xlu0 0
        %372 = vperm.xlu0 %371, %v310
        %v373 = vpop.permute.xlu0 %372
        %376 = vset.pattern.permute.xlu0 0
        %377 = vperm.xlu0 %376, %v311
        %v378 = vpop.permute.xlu0 %377
        %381 = vset.pattern.permute.xlu0 0
        %382 = vperm.xlu0 %381, %v312
        %v383 = vpop.permute.xlu0 %382
        %386 = vset.pattern.permute.xlu0 0
        %387 = vperm.xlu0 %386, %v313
        %v388 = vpop.permute.xlu0 %387
        %391 = vset.pattern.permute.xlu0 0
        %392 = vperm.xlu0 %391, %v314
        %v393 = vpop.permute.xlu0 %392
        %v411 = vunpack.c.l.b16 %v283
        %v412 = vunpack.c.l.b16 %v284
        %v413 = vunpack.c.l.b16 %v285
        %v414 = vunpack.c.l.b16 %v286
        %v415 = vunpack.c.l.b16 %v287
        %v416 = vunpack.c.l.b16 %v288
        %v417 = vunpack.c.l.b16 %v289
        %v418 = vunpack.c.l.b16 %v290
        %v419 = vunpack.c.l.b16 %v291
        %v420 = vunpack.c.l.b16 %v292
        %v421 = vunpack.c.l.b16 %v293
        %v422 = vunpack.c.l.b16 %v294
        %v423 = vunpack.c.l.b16 %v295
        %v424 = vunpack.c.l.b16 %v296
        %v425 = vunpack.c.l.b16 %v297
        %v426 = vunpack.c.l.b16 %v298
        %v427 = vpack.c.b16 %v412, %v411
        %v428 = vpack.c.b16 %v414, %v413
        %v429 = vpack.c.b16 %v416, %v415
        %v430 = vpack.c.b16 %v418, %v417
        %v431 = vpack.c.b16 %v420, %v419
        %v432 = vpack.c.b16 %v422, %v421
        %v433 = vpack.c.b16 %v424, %v423
        %v434 = vpack.c.b16 %v426, %v425
        %v439 = vunpack.c.l.b16 %v279
        %v440 = vunpack.c.h.b16 %v279
        %v441 = vunpack.c.l.b16 %v280
        %v442 = vunpack.c.h.b16 %v280
        %v443 = vunpack.c.l.b16 %v281
        %v444 = vunpack.c.h.b16 %v281
        %v445 = vunpack.c.l.b16 %v282
        %v446 = vunpack.c.h.b16 %v282
        %v447 = vpack.c.b16 %v443, %v439
        %v448 = vpack.c.b16 %v444, %v440
        %v449 = vpack.c.b16 %v445, %v441
        %v450 = vpack.c.b16 %v446, %v442
        %vm455 = vcmask 130048
        %v457 = vsel %vm455, %v427, 0
        %v460 = vsel %vm455, %v428, 0
        %v463 = vsel %vm455, %v429, 0
        %v466 = vsel %vm455, %v430, 0
        %v469 = vsel %vm455, %v431, 0
        %v472 = vsel %vm455, %v432, 0
        %v475 = vsel %vm455, %v433, 0
        %v478 = vsel %vm455, %v434, 0
        %480 = vmatprep.subr.bf16.mxu0 0
        %481 = vmatpush1.bf16.msra.mxu0 0
        %482 = vmatprep.subr.bf16.mxu0 0
        %483 = vmatpush1.bf16.msra.mxu0 0
        %484 = vmatprep.subr.bf16.mxu0 0
        %485 = vmatpush1.bf16.msra.mxu0 0
        %486 = vmatprep.subr.bf16.mxu0 0
        %487 = vmatpush1.bf16.msra.mxu0 0
        %488 = vmatprep.subr.bf16.mxu0 0
        %489 = vmatpush1.bf16.msra.mxu0 0
        %490 = vmatprep.subr.bf16.mxu0 0
        %491 = vmatpush1.bf16.msra.mxu0 0
        %492 = vmatprep.subr.bf16.mxu0 0
        %493 = vmatpush1.bf16.msra.mxu0 0
        %494 = vmatprep.subr.bf16.mxu0 %v448
        %495 = vmatpush1.bf16.msra.mxu0 %v447
        %496 = vmatprep.subr.bf16.mxu0 0
        %497 = vmatpush2.bf16.msra.mxu0 0
        %498 = vmatprep.subr.bf16.mxu0 0
        %499 = vmatpush2.bf16.msra.mxu0 0
        %500 = vmatprep.subr.bf16.mxu0 0
        %501 = vmatpush2.bf16.msra.mxu0 0
        %502 = vmatprep.subr.bf16.mxu0 0
        %503 = vmatpush2.bf16.msra.mxu0 0
        %504 = vmatprep.subr.bf16.mxu0 0
        %505 = vmatpush2.bf16.msra.mxu0 0
        %506 = vmatprep.subr.bf16.mxu0 0
        %507 = vmatpush2.bf16.msra.mxu0 0
        %508 = vmatprep.subr.bf16.mxu0 0
        %509 = vmatpush2.bf16.msra.mxu0 0
        %510 = vmatprep.subr.bf16.mxu0 0
        %511 = vmatpush2.bf16.msra.mxu0 0
        %512 = vmatprep.mubr.bf16.mxu0 0
        %513 = vmatmul.mubr.bf16.gmra.mxu0 %v457
        %v514 = vpop.f32.mrf.mxu0
        %v515 = vadd.f32 %v318, %v514
        %v516 = vpop.f32.mrf.mxu0
        %v517 = vadd.f32 %v318, %v516
        %v518 = vpop.f32.mrf.mxu0
        %v519 = vadd.f32 %v323, %v518
        %v520 = vpop.f32.mrf.mxu0
        %v521 = vadd.f32 %v323, %v520
        %522 = vmatprep.mubr.bf16.mxu0 0
        %523 = vmatmul.mubr.bf16.gmra.mxu0 %v460
        %v524 = vpop.f32.mrf.mxu0
        %v525 = vadd.f32 %v328, %v524
        %v526 = vpop.f32.mrf.mxu0
        %v527 = vadd.f32 %v328, %v526
        %v528 = vpop.f32.mrf.mxu0
        %v529 = vadd.f32 %v333, %v528
        %v530 = vpop.f32.mrf.mxu0
        %v531 = vadd.f32 %v333, %v530
        %532 = vmatprep.mubr.bf16.mxu0 0
        %533 = vmatmul.mubr.bf16.gmra.mxu0 %v463
        %v534 = vpop.f32.mrf.mxu0
        %v535 = vadd.f32 %v338, %v534
        %v536 = vpop.f32.mrf.mxu0
        %v537 = vadd.f32 %v338, %v536
        %v538 = vpop.f32.mrf.mxu0
        %v539 = vadd.f32 %v343, %v538
        %v540 = vpop.f32.mrf.mxu0
        %v541 = vadd.f32 %v343, %v540
        %542 = vmatprep.mubr.bf16.mxu0 0
        %543 = vmatmul.mubr.bf16.gmra.mxu0 %v466
        %v544 = vpop.f32.mrf.mxu0
        %v545 = vadd.f32 %v348, %v544
        %v546 = vpop.f32.mrf.mxu0
        %v547 = vadd.f32 %v348, %v546
        %v548 = vpop.f32.mrf.mxu0
        %v549 = vadd.f32 %v353, %v548
        %v550 = vpop.f32.mrf.mxu0
        %v551 = vadd.f32 %v353, %v550
        %552 = vmatprep.mubr.bf16.mxu0 0
        %553 = vmatmul.mubr.bf16.gmra.mxu0 %v469
        %v554 = vpop.f32.mrf.mxu0
        %v555 = vadd.f32 %v358, %v554
        %v556 = vpop.f32.mrf.mxu0
        %v557 = vadd.f32 %v358, %v556
        %v558 = vpop.f32.mrf.mxu0
        %v559 = vadd.f32 %v363, %v558
        %v560 = vpop.f32.mrf.mxu0
        %v561 = vadd.f32 %v363, %v560
        %562 = vmatprep.mubr.bf16.mxu0 0
        %563 = vmatmul.mubr.bf16.gmra.mxu0 %v472
        %v564 = vpop.f32.mrf.mxu0
        %v565 = vadd.f32 %v368, %v564
        %v566 = vpop.f32.mrf.mxu0
        %v567 = vadd.f32 %v368, %v566
        %v568 = vpop.f32.mrf.mxu0
        %v569 = vadd.f32 %v373, %v568
        %v570 = vpop.f32.mrf.mxu0
        %v571 = vadd.f32 %v373, %v570
        %572 = vmatprep.mubr.bf16.mxu0 0
        %573 = vmatmul.mubr.bf16.gmra.mxu0 %v475
        %v574 = vpop.f32.mrf.mxu0
        %v575 = vadd.f32 %v378, %v574
        %v576 = vpop.f32.mrf.mxu0
        %v577 = vadd.f32 %v378, %v576
        %v578 = vpop.f32.mrf.mxu0
        %v579 = vadd.f32 %v383, %v578
        %v580 = vpop.f32.mrf.mxu0
        %v581 = vadd.f32 %v383, %v580
        %582 = vmatprep.mubr.bf16.mxu0 0
        %583 = vmatmul.mubr.bf16.gmra.mxu0 %v478
        %v584 = vpop.f32.mrf.mxu0
        %v585 = vadd.f32 %v388, %v584
        %v586 = vpop.f32.mrf.mxu0
        %v587 = vadd.f32 %v388, %v586
        %v588 = vpop.f32.mrf.mxu0
        %v589 = vadd.f32 %v393, %v588
        %v590 = vpop.f32.mrf.mxu0
        %v591 = vadd.f32 %v393, %v590
        %592 = vdwg.mxu0
        %593 = vmatprep.subr.bf16.mxu0 0
        %594 = vmatpush1.bf16.msra.mxu0 0
        %595 = vmatprep.subr.bf16.mxu0 0
        %596 = vmatpush1.bf16.msra.mxu0 0
        %597 = vmatprep.subr.bf16.mxu0 0
        %598 = vmatpush1.bf16.msra.mxu0 0
        %599 = vmatprep.subr.bf16.mxu0 0
        %600 = vmatpush1.bf16.msra.mxu0 0
        %601 = vmatprep.subr.bf16.mxu0 0
        %602 = vmatpush1.bf16.msra.mxu0 0
        %603 = vmatprep.subr.bf16.mxu0 0
        %604 = vmatpush1.bf16.msra.mxu0 0
        %605 = vmatprep.subr.bf16.mxu0 0
        %606 = vmatpush1.bf16.msra.mxu0 0
        %607 = vmatprep.subr.bf16.mxu0 %v450
        %608 = vmatpush1.bf16.msra.mxu0 %v449
        %609 = vmatprep.subr.bf16.mxu0 0
        %610 = vmatpush2.bf16.msra.mxu0 0
        %611 = vmatprep.subr.bf16.mxu0 0
        %612 = vmatpush2.bf16.msra.mxu0 0
        %613 = vmatprep.subr.bf16.mxu0 0
        %614 = vmatpush2.bf16.msra.mxu0 0
        %615 = vmatprep.subr.bf16.mxu0 0
        %616 = vmatpush2.bf16.msra.mxu0 0
        %617 = vmatprep.subr.bf16.mxu0 0
        %618 = vmatpush2.bf16.msra.mxu0 0
        %619 = vmatprep.subr.bf16.mxu0 0
        %620 = vmatpush2.bf16.msra.mxu0 0
        %621 = vmatprep.subr.bf16.mxu0 0
        %622 = vmatpush2.bf16.msra.mxu0 0
        %623 = vmatprep.subr.bf16.mxu0 0
        %624 = vmatpush2.bf16.msra.mxu0 0
        %625 = vmatprep.mubr.bf16.mxu0 0
        %626 = vmatmul.mubr.bf16.gmra.mxu0 %v457
        %v627 = vpop.f32.mrf.mxu0
        %v628 = vadd.f32 %v318, %v627
        %v629 = vpop.f32.mrf.mxu0
        %v630 = vadd.f32 %v318, %v629
        %v631 = vpop.f32.mrf.mxu0
        %v632 = vadd.f32 %v323, %v631
        %v633 = vpop.f32.mrf.mxu0
        %v634 = vadd.f32 %v323, %v633
        %635 = vmatprep.mubr.bf16.mxu0 0
        %636 = vmatmul.mubr.bf16.gmra.mxu0 %v460
        %v637 = vpop.f32.mrf.mxu0
        %v638 = vadd.f32 %v328, %v637
        %v639 = vpop.f32.mrf.mxu0
        %v640 = vadd.f32 %v328, %v639
        %v641 = vpop.f32.mrf.mxu0
        %v642 = vadd.f32 %v333, %v641
        %v643 = vpop.f32.mrf.mxu0
        %v644 = vadd.f32 %v333, %v643
        %645 = vmatprep.mubr.bf16.mxu0 0
        %646 = vmatmul.mubr.bf16.gmra.mxu0 %v463
        %v647 = vpop.f32.mrf.mxu0
        %v648 = vadd.f32 %v338, %v647
        %v649 = vpop.f32.mrf.mxu0
        %v650 = vadd.f32 %v338, %v649
        %v651 = vpop.f32.mrf.mxu0
        %v652 = vadd.f32 %v343, %v651
        %v653 = vpop.f32.mrf.mxu0
        %v654 = vadd.f32 %v343, %v653
        %655 = vmatprep.mubr.bf16.mxu0 0
        %656 = vmatmul.mubr.bf16.gmra.mxu0 %v466
        %v657 = vpop.f32.mrf.mxu0
        %v658 = vadd.f32 %v348, %v657
        %v659 = vpop.f32.mrf.mxu0
        %v660 = vadd.f32 %v348, %v659
        %v661 = vpop.f32.mrf.mxu0
        %v662 = vadd.f32 %v353, %v661
        %v663 = vpop.f32.mrf.mxu0
        %v664 = vadd.f32 %v353, %v663
        %665 = vmatprep.mubr.bf16.mxu0 0
        %666 = vmatmul.mubr.bf16.gmra.mxu0 %v469
        %v667 = vpop.f32.mrf.mxu0
        %v668 = vadd.f32 %v358, %v667
        %v669 = vpop.f32.mrf.mxu0
        %v670 = vadd.f32 %v358, %v669
        %v671 = vpop.f32.mrf.mxu0
        %v672 = vadd.f32 %v363, %v671
        %v673 = vpop.f32.mrf.mxu0
        %v674 = vadd.f32 %v363, %v673
        %675 = vmatprep.mubr.bf16.mxu0 0
        %676 = vmatmul.mubr.bf16.gmra.mxu0 %v472
        %v677 = vpop.f32.mrf.mxu0
        %v678 = vadd.f32 %v368, %v677
        %v679 = vpop.f32.mrf.mxu0
        %v680 = vadd.f32 %v368, %v679
        %v681 = vpop.f32.mrf.mxu0
        %v682 = vadd.f32 %v373, %v681
        %v683 = vpop.f32.mrf.mxu0
        %v684 = vadd.f32 %v373, %v683
        %685 = vmatprep.mubr.bf16.mxu0 0
        %686 = vmatmul.mubr.bf16.gmra.mxu0 %v475
        %v687 = vpop.f32.mrf.mxu0
        %v688 = vadd.f32 %v378, %v687
        %v689 = vpop.f32.mrf.mxu0
        %v690 = vadd.f32 %v378, %v689
        %v691 = vpop.f32.mrf.mxu0
        %v692 = vadd.f32 %v383, %v691
        %v693 = vpop.f32.mrf.mxu0
        %v694 = vadd.f32 %v383, %v693
        %695 = vmatprep.mubr.bf16.mxu0 0
        %696 = vmatmul.mubr.bf16.gmra.mxu0 %v478
        %v697 = vpop.f32.mrf.mxu0
        %v698 = vadd.f32 %v388, %v697
        %v699 = vpop.f32.mrf.mxu0
        %v700 = vadd.f32 %v388, %v699
        %v701 = vpop.f32.mrf.mxu0
        %v702 = vadd.f32 %v393, %v701
        %v703 = vpop.f32.mrf.mxu0
        %v704 = vadd.f32 %v393, %v703
        %705 = vdwg.mxu0
        %v706 = vpack.c.bf16 %v519, %v515
        %v707 = vpack.c.bf16 %v521, %v517
        %v708 = vpack.c.bf16 %v632, %v628
        %v709 = vpack.c.bf16 %v634, %v630
        %v710 = vpack.c.bf16 %v529, %v525
        %v711 = vpack.c.bf16 %v531, %v527
        %v712 = vpack.c.bf16 %v642, %v638
        %v713 = vpack.c.bf16 %v644, %v640
        %v714 = vpack.c.bf16 %v539, %v535
        %v715 = vpack.c.bf16 %v541, %v537
        %v716 = vpack.c.bf16 %v652, %v648
        %v717 = vpack.c.bf16 %v654, %v650
        %v718 = vpack.c.bf16 %v549, %v545
        %v719 = vpack.c.bf16 %v551, %v547
        %v720 = vpack.c.bf16 %v662, %v658
        %v721 = vpack.c.bf16 %v664, %v660
        %v722 = vpack.c.bf16 %v559, %v555
        %v723 = vpack.c.bf16 %v561, %v557
        %v724 = vpack.c.bf16 %v672, %v668
        %v725 = vpack.c.bf16 %v674, %v670
        %v726 = vpack.c.bf16 %v569, %v565
        %v727 = vpack.c.bf16 %v571, %v567
        %v728 = vpack.c.bf16 %v682, %v678
        %v729 = vpack.c.bf16 %v684, %v680
        %v730 = vpack.c.bf16 %v579, %v575
        %v731 = vpack.c.bf16 %v581, %v577
        %v732 = vpack.c.bf16 %v692, %v688
        %v733 = vpack.c.bf16 %v694, %v690
        %v734 = vpack.c.bf16 %v589, %v585
        %v735 = vpack.c.bf16 %v591, %v587
        %v736 = vpack.c.bf16 %v702, %v698
        %v737 = vpack.c.bf16 %v704, %v700
        %v738 = vtanh.bf16.pop %v706
        %v739 = vtanh.bf16.pop %v707
        %v740 = vtanh.bf16.pop %v708
        %v741 = vtanh.bf16.pop %v709
        %v742 = vtanh.bf16.pop %v710
        %v743 = vtanh.bf16.pop %v711
        %v744 = vtanh.bf16.pop %v712
        %v745 = vtanh.bf16.pop %v713
        %v746 = vtanh.bf16.pop %v714
        %v747 = vtanh.bf16.pop %v715
        %v748 = vtanh.bf16.pop %v716
        %v749 = vtanh.bf16.pop %v717
        %v750 = vtanh.bf16.pop %v718
        %v751 = vtanh.bf16.pop %v719
        %v752 = vtanh.bf16.pop %v720
        %v753 = vtanh.bf16.pop %v721
        %v754 = vtanh.bf16.pop %v722
        %v755 = vtanh.bf16.pop %v723
        %v756 = vtanh.bf16.pop %v724
        %v757 = vtanh.bf16.pop %v725
        %v758 = vtanh.bf16.pop %v726
        %v759 = vtanh.bf16.pop %v727
        %v760 = vtanh.bf16.pop %v728
        %v761 = vtanh.bf16.pop %v729
        %v762 = vtanh.bf16.pop %v730
        %v763 = vtanh.bf16.pop %v731
        %v764 = vtanh.bf16.pop %v732
        %v765 = vtanh.bf16.pop %v733
        %v766 = vtanh.bf16.pop %v734
        %v767 = vtanh.bf16.pop %v735
        %v768 = vtanh.bf16.pop %v736
        %v769 = vtanh.bf16.pop %v737
        %v770 = vld [vmem:[%s3] sm:$0xf]
        %v771 = vld [vmem:[%s3 + $0x4] sm:$0xf]
        %v772 = vld [vmem:[%s3 + $0x8] sm:$0xf]
        %v773 = vld [vmem:[%s3 + $0xc] sm:$0xf]
        %v774 = vld [vmem:[%s3 + $0x10] sm:$0xf]
        %v775 = vld [vmem:[%s3 + $0x14] sm:$0xf]
        %v776 = vld [vmem:[%s3 + $0x18] sm:$0xf]
        %v777 = vld [vmem:[%s3 + $0x1c] sm:$0xf]
        %v778 = vld [vmem:[%s3 + $0x20] sm:$0xf]
        %v779 = vld [vmem:[%s3 + $0x24] sm:$0xf]
        %v780 = vld [vmem:[%s3 + $0x28] sm:$0xf]
        %v781 = vld [vmem:[%s3 + $0x2c] sm:$0xf]
        %v782 = vld [vmem:[%s3 + $0x30] sm:$0xf]
        %v783 = vld [vmem:[%s3 + $0x34] sm:$0xf]
        %v784 = vld [vmem:[%s3 + $0x38] sm:$0xf]
        %v785 = vld [vmem:[%s3 + $0x3c] sm:$0xf]
        %v786 = vld [vmem:[%s4] sm:$0xff]
        %v787 = vld [vmem:[%s4 + $0x8] sm:$0xff]
        %v788 = vld [vmem:[%s4 + $0x10] sm:$0xff]
        %v789 = vld [vmem:[%s4 + $0x18] sm:$0xff]
        %v790 = vld [vmem:[%s4 + $0x20] sm:$0xff]
        %v791 = vld [vmem:[%s4 + $0x28] sm:$0xff]
        %v792 = vld [vmem:[%s4 + $0x30] sm:$0xff]
        %v793 = vld [vmem:[%s4 + $0x38] sm:$0xff]
        %v794 = vld [vmem:[%s4 + $0x40] sm:$0xff]
        %v795 = vld [vmem:[%s4 + $0x48] sm:$0xff]
        %v796 = vld [vmem:[%s4 + $0x50] sm:$0xff]
        %v797 = vld [vmem:[%s4 + $0x58] sm:$0xff]
        %v798 = vld [vmem:[%s4 + $0x60] sm:$0xff]
        %v799 = vld [vmem:[%s4 + $0x68] sm:$0xff]
        %v800 = vld [vmem:[%s4 + $0x70] sm:$0xff]
        %v801 = vld [vmem:[%s4 + $0x78] sm:$0xff]
        %803 = vset.pattern.permute.xlu0 0
        %804 = vperm.xlu0 %803, %v786
        %v805 = vpop.permute.xlu0 %804
        %808 = vset.pattern.permute.xlu0 0
        %809 = vperm.xlu0 %808, %v787
        %v810 = vpop.permute.xlu0 %809
        %813 = vset.pattern.permute.xlu0 0
        %814 = vperm.xlu0 %813, %v788
        %v815 = vpop.permute.xlu0 %814
        %818 = vset.pattern.permute.xlu0 0
        %819 = vperm.xlu0 %818, %v789
        %v820 = vpop.permute.xlu0 %819
        %823 = vset.pattern.permute.xlu0 0
        %824 = vperm.xlu0 %823, %v790
        %v825 = vpop.permute.xlu0 %824
        %828 = vset.pattern.permute.xlu0 0
        %829 = vperm.xlu0 %828, %v791
        %v830 = vpop.permute.xlu0 %829
        %833 = vset.pattern.permute.xlu0 0
        %834 = vperm.xlu0 %833, %v792
        %v835 = vpop.permute.xlu0 %834
        %838 = vset.pattern.permute.xlu0 0
        %839 = vperm.xlu0 %838, %v793
        %v840 = vpop.permute.xlu0 %839
        %843 = vset.pattern.permute.xlu0 0
        %844 = vperm.xlu0 %843, %v794
        %v845 = vpop.permute.xlu0 %844
        %848 = vset.pattern.permute.xlu0 0
        %849 = vperm.xlu0 %848, %v795
        %v850 = vpop.permute.xlu0 %849
        %853 = vset.pattern.permute.xlu0 0
        %854 = vperm.xlu0 %853, %v796
        %v855 = vpop.permute.xlu0 %854
        %858 = vset.pattern.permute.xlu0 0
        %859 = vperm.xlu0 %858, %v797
        %v860 = vpop.permute.xlu0 %859
        %863 = vset.pattern.permute.xlu0 0
        %864 = vperm.xlu0 %863, %v798
        %v865 = vpop.permute.xlu0 %864
        %868 = vset.pattern.permute.xlu0 0
        %869 = vperm.xlu0 %868, %v799
        %v870 = vpop.permute.xlu0 %869
        %873 = vset.pattern.permute.xlu0 0
        %874 = vperm.xlu0 %873, %v800
        %v875 = vpop.permute.xlu0 %874
        %878 = vset.pattern.permute.xlu0 0
        %879 = vperm.xlu0 %878, %v801
        %v880 = vpop.permute.xlu0 %879
        %v898 = vunpack.c.l.b16 %v770
        %v899 = vunpack.c.l.b16 %v771
        %v900 = vunpack.c.l.b16 %v772
        %v901 = vunpack.c.l.b16 %v773
        %v902 = vunpack.c.l.b16 %v774
        %v903 = vunpack.c.l.b16 %v775
        %v904 = vunpack.c.l.b16 %v776
        %v905 = vunpack.c.l.b16 %v777
        %v906 = vunpack.c.l.b16 %v778
        %v907 = vunpack.c.l.b16 %v779
        %v908 = vunpack.c.l.b16 %v780
        %v909 = vunpack.c.l.b16 %v781
        %v910 = vunpack.c.l.b16 %v782
        %v911 = vunpack.c.l.b16 %v783
        %v912 = vunpack.c.l.b16 %v784
        %v913 = vunpack.c.l.b16 %v785
        %v914 = vpack.c.b16 %v899, %v898
        %v915 = vpack.c.b16 %v901, %v900
        %v916 = vpack.c.b16 %v903, %v902
        %v917 = vpack.c.b16 %v905, %v904
        %v918 = vpack.c.b16 %v907, %v906
        %v919 = vpack.c.b16 %v909, %v908
        %v920 = vpack.c.b16 %v911, %v910
        %v921 = vpack.c.b16 %v913, %v912
        %930 = vmatprep.subr.bf16.mxu0 %v767
        %931 = vmatpush1.bf16.msra.mxu0 %v766
        %932 = vmatprep.subr.bf16.mxu0 %v763
        %933 = vmatpush1.bf16.msra.mxu0 %v762
        %934 = vmatprep.subr.bf16.mxu0 %v759
        %935 = vmatpush1.bf16.msra.mxu0 %v758
        %936 = vmatprep.subr.bf16.mxu0 %v755
        %937 = vmatpush1.bf16.msra.mxu0 %v754
        %938 = vmatprep.subr.bf16.mxu0 %v751
        %939 = vmatpush1.bf16.msra.mxu0 %v750
        %940 = vmatprep.subr.bf16.mxu0 %v747
        %941 = vmatpush1.bf16.msra.mxu0 %v746
        %942 = vmatprep.subr.bf16.mxu0 %v743
        %943 = vmatpush1.bf16.msra.mxu0 %v742
        %944 = vmatprep.subr.bf16.mxu0 %v739
        %945 = vmatpush1.bf16.msra.mxu0 %v738
        %946 = vmatprep.subr.bf16.mxu0 0
        %947 = vmatpush2.bf16.msra.mxu0 0
        %948 = vmatprep.subr.bf16.mxu0 0
        %949 = vmatpush2.bf16.msra.mxu0 0
        %950 = vmatprep.subr.bf16.mxu0 0
        %951 = vmatpush2.bf16.msra.mxu0 0
        %952 = vmatprep.subr.bf16.mxu0 0
        %953 = vmatpush2.bf16.msra.mxu0 0
        %954 = vmatprep.subr.bf16.mxu0 0
        %955 = vmatpush2.bf16.msra.mxu0 0
        %956 = vmatprep.subr.bf16.mxu0 0
        %957 = vmatpush2.bf16.msra.mxu0 0
        %958 = vmatprep.subr.bf16.mxu0 0
        %959 = vmatpush2.bf16.msra.mxu0 0
        %960 = vmatprep.subr.bf16.mxu0 0
        %961 = vmatpush2.bf16.msra.mxu0 0
        %962 = vmatprep.mubr.bf16.mxu0 0
        %963 = vmatmul.mubr.bf16.gmra.mxu0 %v914
        %v964 = vpop.f32.mrf.mxu0
        %v965 = vadd.f32 %v805, %v964
        %v966 = vpop.f32.mrf.mxu0
        %v967 = vadd.f32 %v805, %v966
        %v968 = vpop.f32.mrf.mxu0
        %v969 = vadd.f32 %v810, %v968
        %v970 = vpop.f32.mrf.mxu0
        %v971 = vadd.f32 %v810, %v970
        %972 = vmatprep.mubr.bf16.mxu0 0
        %973 = vmatmul.mubr.bf16.gmra.mxu0 %v915
        %v974 = vpop.f32.mrf.mxu0
        %v975 = vadd.f32 %v815, %v974
        %v976 = vpop.f32.mrf.mxu0
        %v977 = vadd.f32 %v815, %v976
        %v978 = vpop.f32.mrf.mxu0
        %v979 = vadd.f32 %v820, %v978
        %v980 = vpop.f32.mrf.mxu0
        %v981 = vadd.f32 %v820, %v980
        %982 = vmatprep.mubr.bf16.mxu0 0
        %983 = vmatmul.mubr.bf16.gmra.mxu0 %v916
        %v984 = vpop.f32.mrf.mxu0
        %v985 = vadd.f32 %v825, %v984
        %v986 = vpop.f32.mrf.mxu0
        %v987 = vadd.f32 %v825, %v986
        %v988 = vpop.f32.mrf.mxu0
        %v989 = vadd.f32 %v830, %v988
        %v990 = vpop.f32.mrf.mxu0
        %v991 = vadd.f32 %v830, %v990
        %992 = vmatprep.mubr.bf16.mxu0 0
        %993 = vmatmul.mubr.bf16.gmra.mxu0 %v917
        %v994 = vpop.f32.mrf.mxu0
        %v995 = vadd.f32 %v835, %v994
        %v996 = vpop.f32.mrf.mxu0
        %v997 = vadd.f32 %v835, %v996
        %v998 = vpop.f32.mrf.mxu0
        %v999 = vadd.f32 %v840, %v998
        %v1000 = vpop.f32.mrf.mxu0
        %v1001 = vadd.f32 %v840, %v1000
        %1002 = vmatprep.mubr.bf16.mxu0 0
        %1003 = vmatmul.mubr.bf16.gmra.mxu0 %v918
        %v1004 = vpop.f32.mrf.mxu0
        %v1005 = vadd.f32 %v845, %v1004
        %v1006 = vpop.f32.mrf.mxu0
        %v1007 = vadd.f32 %v845, %v1006
        %v1008 = vpop.f32.mrf.mxu0
        %v1009 = vadd.f32 %v850, %v1008
        %v1010 = vpop.f32.mrf.mxu0
        %v1011 = vadd.f32 %v850, %v1010
        %1012 = vmatprep.mubr.bf16.mxu0 0
        %1013 = vmatmul.mubr.bf16.gmra.mxu0 %v919
        %v1014 = vpop.f32.mrf.mxu0
        %v1015 = vadd.f32 %v855, %v1014
        %v1016 = vpop.f32.mrf.mxu0
        %v1017 = vadd.f32 %v855, %v1016
        %v1018 = vpop.f32.mrf.mxu0
        %v1019 = vadd.f32 %v860, %v1018
        %v1020 = vpop.f32.mrf.mxu0
        %v1021 = vadd.f32 %v860, %v1020
        %1022 = vmatprep.mubr.bf16.mxu0 0
        %1023 = vmatmul.mubr.bf16.gmra.mxu0 %v920
        %v1024 = vpop.f32.mrf.mxu0
        %v1025 = vadd.f32 %v865, %v1024
        %v1026 = vpop.f32.mrf.mxu0
        %v1027 = vadd.f32 %v865, %v1026
        %v1028 = vpop.f32.mrf.mxu0
        %v1029 = vadd.f32 %v870, %v1028
        %v1030 = vpop.f32.mrf.mxu0
        %v1031 = vadd.f32 %v870, %v1030
        %1032 = vmatprep.mubr.bf16.mxu0 0
        %1033 = vmatmul.mubr.bf16.gmra.mxu0 %v921
        %v1034 = vpop.f32.mrf.mxu0
        %v1035 = vadd.f32 %v875, %v1034
        %v1036 = vpop.f32.mrf.mxu0
        %v1037 = vadd.f32 %v875, %v1036
        %v1038 = vpop.f32.mrf.mxu0
        %v1039 = vadd.f32 %v880, %v1038
        %v1040 = vpop.f32.mrf.mxu0
        %v1041 = vadd.f32 %v880, %v1040
        %1042 = vdwg.mxu0
        %1043 = vmatprep.subr.bf16.mxu0 %v769
        %1044 = vmatpush1.bf16.msra.mxu0 %v768
        %1045 = vmatprep.subr.bf16.mxu0 %v765
        %1046 = vmatpush1.bf16.msra.mxu0 %v764
        %1047 = vmatprep.subr.bf16.mxu0 %v761
        %1048 = vmatpush1.bf16.msra.mxu0 %v760
        %1049 = vmatprep.subr.bf16.mxu0 %v757
        %1050 = vmatpush1.bf16.msra.mxu0 %v756
        %1051 = vmatprep.subr.bf16.mxu0 %v753
        %1052 = vmatpush1.bf16.msra.mxu0 %v752
        %1053 = vmatprep.subr.bf16.mxu0 %v749
        %1054 = vmatpush1.bf16.msra.mxu0 %v748
        %1055 = vmatprep.subr.bf16.mxu0 %v745
        %1056 = vmatpush1.bf16.msra.mxu0 %v744
        %1057 = vmatprep.subr.bf16.mxu0 %v741
        %1058 = vmatpush1.bf16.msra.mxu0 %v740
        %1059 = vmatprep.subr.bf16.mxu0 0
        %1060 = vmatpush2.bf16.msra.mxu0 0
        %1061 = vmatprep.subr.bf16.mxu0 0
        %1062 = vmatpush2.bf16.msra.mxu0 0
        %1063 = vmatprep.subr.bf16.mxu0 0
        %1064 = vmatpush2.bf16.msra.mxu0 0
        %1065 = vmatprep.subr.bf16.mxu0 0
        %1066 = vmatpush2.bf16.msra.mxu0 0
        %1067 = vmatprep.subr.bf16.mxu0 0
        %1068 = vmatpush2.bf16.msra.mxu0 0
        %1069 = vmatprep.subr.bf16.mxu0 0
        %1070 = vmatpush2.bf16.msra.mxu0 0
        %1071 = vmatprep.subr.bf16.mxu0 0
        %1072 = vmatpush2.bf16.msra.mxu0 0
        %1073 = vmatprep.subr.bf16.mxu0 0
        %1074 = vmatpush2.bf16.msra.mxu0 0
        %1075 = vmatprep.mubr.bf16.mxu0 0
        %1076 = vmatmul.mubr.bf16.gmra.mxu0 %v914
        %v1077 = vpop.f32.mrf.mxu0
        %v1078 = vadd.f32 %v805, %v1077
        %v1079 = vpop.f32.mrf.mxu0
        %v1080 = vadd.f32 %v805, %v1079
        %v1081 = vpop.f32.mrf.mxu0
        %v1082 = vadd.f32 %v810, %v1081
        %v1083 = vpop.f32.mrf.mxu0
        %v1084 = vadd.f32 %v810, %v1083
        %1085 = vmatprep.mubr.bf16.mxu0 0
        %1086 = vmatmul.mubr.bf16.gmra.mxu0 %v915
        %v1087 = vpop.f32.mrf.mxu0
        %v1088 = vadd.f32 %v815, %v1087
        %v1089 = vpop.f32.mrf.mxu0
        %v1090 = vadd.f32 %v815, %v1089
        %v1091 = vpop.f32.mrf.mxu0
        %v1092 = vadd.f32 %v820, %v1091
        %v1093 = vpop.f32.mrf.mxu0
        %v1094 = vadd.f32 %v820, %v1093
        %1095 = vmatprep.mubr.bf16.mxu0 0
        %1096 = vmatmul.mubr.bf16.gmra.mxu0 %v916
        %v1097 = vpop.f32.mrf.mxu0
        %v1098 = vadd.f32 %v825, %v1097
        %v1099 = vpop.f32.mrf.mxu0
        %v1100 = vadd.f32 %v825, %v1099
        %v1101 = vpop.f32.mrf.mxu0
        %v1102 = vadd.f32 %v830, %v1101
        %v1103 = vpop.f32.mrf.mxu0
        %v1104 = vadd.f32 %v830, %v1103
        %1105 = vmatprep.mubr.bf16.mxu0 0
        %1106 = vmatmul.mubr.bf16.gmra.mxu0 %v917
        %v1107 = vpop.f32.mrf.mxu0
        %v1108 = vadd.f32 %v835, %v1107
        %v1109 = vpop.f32.mrf.mxu0
        %v1110 = vadd.f32 %v835, %v1109
        %v1111 = vpop.f32.mrf.mxu0
        %v1112 = vadd.f32 %v840, %v1111
        %v1113 = vpop.f32.mrf.mxu0
        %v1114 = vadd.f32 %v840, %v1113
        %1115 = vmatprep.mubr.bf16.mxu0 0
        %1116 = vmatmul.mubr.bf16.gmra.mxu0 %v918
        %v1117 = vpop.f32.mrf.mxu0
        %v1118 = vadd.f32 %v845, %v1117
        %v1119 = vpop.f32.mrf.mxu0
        %v1120 = vadd.f32 %v845, %v1119
        %v1121 = vpop.f32.mrf.mxu0
        %v1122 = vadd.f32 %v850, %v1121
        %v1123 = vpop.f32.mrf.mxu0
        %v1124 = vadd.f32 %v850, %v1123
        %1125 = vmatprep.mubr.bf16.mxu0 0
        %1126 = vmatmul.mubr.bf16.gmra.mxu0 %v919
        %v1127 = vpop.f32.mrf.mxu0
        %v1128 = vadd.f32 %v855, %v1127
        %v1129 = vpop.f32.mrf.mxu0
        %v1130 = vadd.f32 %v855, %v1129
        %v1131 = vpop.f32.mrf.mxu0
        %v1132 = vadd.f32 %v860, %v1131
        %v1133 = vpop.f32.mrf.mxu0
        %v1134 = vadd.f32 %v860, %v1133
        %1135 = vmatprep.mubr.bf16.mxu0 0
        %1136 = vmatmul.mubr.bf16.gmra.mxu0 %v920
        %v1137 = vpop.f32.mrf.mxu0
        %v1138 = vadd.f32 %v865, %v1137
        %v1139 = vpop.f32.mrf.mxu0
        %v1140 = vadd.f32 %v865, %v1139
        %v1141 = vpop.f32.mrf.mxu0
        %v1142 = vadd.f32 %v870, %v1141
        %v1143 = vpop.f32.mrf.mxu0
        %v1144 = vadd.f32 %v870, %v1143
        %1145 = vmatprep.mubr.bf16.mxu0 0
        %1146 = vmatmul.mubr.bf16.gmra.mxu0 %v921
        %v1147 = vpop.f32.mrf.mxu0
        %v1148 = vadd.f32 %v875, %v1147
        %v1149 = vpop.f32.mrf.mxu0
        %v1150 = vadd.f32 %v875, %v1149
        %v1151 = vpop.f32.mrf.mxu0
        %v1152 = vadd.f32 %v880, %v1151
        %v1153 = vpop.f32.mrf.mxu0
        %v1154 = vadd.f32 %v880, %v1153
        %1155 = vdwg.mxu0
        %v1156 = vpack.c.bf16 %v969, %v965
        %v1157 = vpack.c.bf16 %v971, %v967
        %v1158 = vpack.c.bf16 %v1082, %v1078
        %v1159 = vpack.c.bf16 %v1084, %v1080
        %v1160 = vpack.c.bf16 %v979, %v975
        %v1161 = vpack.c.bf16 %v981, %v977
        %v1162 = vpack.c.bf16 %v1092, %v1088
        %v1163 = vpack.c.bf16 %v1094, %v1090
        %v1164 = vpack.c.bf16 %v989, %v985
        %v1165 = vpack.c.bf16 %v991, %v987
        %v1166 = vpack.c.bf16 %v1102, %v1098
        %v1167 = vpack.c.bf16 %v1104, %v1100
        %v1168 = vpack.c.bf16 %v999, %v995
        %v1169 = vpack.c.bf16 %v1001, %v997
        %v1170 = vpack.c.bf16 %v1112, %v1108
        %v1171 = vpack.c.bf16 %v1114, %v1110
        %v1172 = vpack.c.bf16 %v1009, %v1005
        %v1173 = vpack.c.bf16 %v1011, %v1007
        %v1174 = vpack.c.bf16 %v1122, %v1118
        %v1175 = vpack.c.bf16 %v1124, %v1120
        %v1176 = vpack.c.bf16 %v1019, %v1015
        %v1177 = vpack.c.bf16 %v1021, %v1017
        %v1178 = vpack.c.bf16 %v1132, %v1128
        %v1179 = vpack.c.bf16 %v1134, %v1130
        %v1180 = vpack.c.bf16 %v1029, %v1025
        %v1181 = vpack.c.bf16 %v1031, %v1027
        %v1182 = vpack.c.bf16 %v1142, %v1138
        %v1183 = vpack.c.bf16 %v1144, %v1140
        %v1184 = vpack.c.bf16 %v1039, %v1035
        %v1185 = vpack.c.bf16 %v1041, %v1037
        %v1186 = vpack.c.bf16 %v1152, %v1148
        %v1187 = vpack.c.bf16 %v1154, %v1150
        %v1188 = vtanh.bf16.pop %v1156
        %v1189 = vtanh.bf16.pop %v1157
        %v1190 = vtanh.bf16.pop %v1158
        %v1191 = vtanh.bf16.pop %v1159
        %v1192 = vtanh.bf16.pop %v1160
        %v1193 = vtanh.bf16.pop %v1161
        %v1194 = vtanh.bf16.pop %v1162
        %v1195 = vtanh.bf16.pop %v1163
        %v1196 = vtanh.bf16.pop %v1164
        %v1197 = vtanh.bf16.pop %v1165
        %v1198 = vtanh.bf16.pop %v1166
        %v1199 = vtanh.bf16.pop %v1167
        %v1200 = vtanh.bf16.pop %v1168
        %v1201 = vtanh.bf16.pop %v1169
        %v1202 = vtanh.bf16.pop %v1170
        %v1203 = vtanh.bf16.pop %v1171
        %v1204 = vtanh.bf16.pop %v1172
        %v1205 = vtanh.bf16.pop %v1173
        %v1206 = vtanh.bf16.pop %v1174
        %v1207 = vtanh.bf16.pop %v1175
        %v1208 = vtanh.bf16.pop %v1176
        %v1209 = vtanh.bf16.pop %v1177
        %v1210 = vtanh.bf16.pop %v1178
        %v1211 = vtanh.bf16.pop %v1179
        %v1212 = vtanh.bf16.pop %v1180
        %v1213 = vtanh.bf16.pop %v1181
        %v1214 = vtanh.bf16.pop %v1182
        %v1215 = vtanh.bf16.pop %v1183
        %v1216 = vtanh.bf16.pop %v1184
        %v1217 = vtanh.bf16.pop %v1185
        %v1218 = vtanh.bf16.pop %v1186
        %v1219 = vtanh.bf16.pop %v1187
        %v1220 = vld [vmem:[%s5] sm:$0xf]
        %1221 = vmatprep.subr.bf16.mxu0 %v1217
        %1222 = vmatpush1.bf16.msra.mxu0 %v1216
        %1223 = vmatprep.subr.bf16.mxu0 %v1213
        %1224 = vmatpush1.bf16.msra.mxu0 %v1212
        %1225 = vmatprep.subr.bf16.mxu0 %v1209
        %1226 = vmatpush1.bf16.msra.mxu0 %v1208
        %1227 = vmatprep.subr.bf16.mxu0 %v1205
        %1228 = vmatpush1.bf16.msra.mxu0 %v1204
        %1229 = vmatprep.subr.bf16.mxu0 %v1201
        %1230 = vmatpush1.bf16.msra.mxu0 %v1200
        %1231 = vmatprep.subr.bf16.mxu0 %v1197
        %1232 = vmatpush1.bf16.msra.mxu0 %v1196
        %1233 = vmatprep.subr.bf16.mxu0 %v1193
        %1234 = vmatpush1.bf16.msra.mxu0 %v1192
        %1235 = vmatprep.subr.bf16.mxu0 %v1189
        %1236 = vmatpush1.bf16.msra.mxu0 %v1188
        %1237 = vmatprep.subr.bf16.mxu0 0
        %1238 = vmatpush2.bf16.msra.mxu0 0
        %1239 = vmatprep.subr.bf16.mxu0 0
        %1240 = vmatpush2.bf16.msra.mxu0 0
        %1241 = vmatprep.subr.bf16.mxu0 0
        %1242 = vmatpush2.bf16.msra.mxu0 0
        %1243 = vmatprep.subr.bf16.mxu0 0
        %1244 = vmatpush2.bf16.msra.mxu0 0
        %1245 = vmatprep.subr.bf16.mxu0 0
        %1246 = vmatpush2.bf16.msra.mxu0 0
        %1247 = vmatprep.subr.bf16.mxu0 0
        %1248 = vmatpush2.bf16.msra.mxu0 0
        %1249 = vmatprep.subr.bf16.mxu0 0
        %1250 = vmatpush2.bf16.msra.mxu0 0
        %1251 = vmatprep.subr.bf16.mxu0 0
        %1252 = vmatpush2.bf16.msra.mxu0 0
        %1253 = vmatprep.mubr.bf16.mxu0 0
        %1254 = vmatmul.mubr.bf16.gmra.mxu0 %v1220
        %v1255 = vpop.f32.mrf.mxu0
        %v1256 = vadd.f32 0.0, %v1255
        %v1257 = vpop.f32.mrf.mxu0
        %v1258 = vadd.f32 0.0, %v1257
        %v1259 = vpop.f32.mrf.mxu0
        %v1260 = vpop.f32.mrf.mxu0
        %1261 = vdwg.mxu0
        %1262 = vmatprep.subr.bf16.mxu0 %v1219
        %1263 = vmatpush1.bf16.msra.mxu0 %v1218
        %1264 = vmatprep.subr.bf16.mxu0 %v1215
        %1265 = vmatpush1.bf16.msra.mxu0 %v1214
        %1266 = vmatprep.subr.bf16.mxu0 %v1211
        %1267 = vmatpush1.bf16.msra.mxu0 %v1210
        %1268 = vmatprep.subr.bf16.mxu0 %v1207
        %1269 = vmatpush1.bf16.msra.mxu0 %v1206
        %1270 = vmatprep.subr.bf16.mxu0 %v1203
        %1271 = vmatpush1.bf16.msra.mxu0 %v1202
        %1272 = vmatprep.subr.bf16.mxu0 %v1199
        %1273 = vmatpush1.bf16.msra.mxu0 %v1198
        %1274 = vmatprep.subr.bf16.mxu0 %v1195
        %1275 = vmatpush1.bf16.msra.mxu0 %v1194
        %1276 = vmatprep.subr.bf16.mxu0 %v1191
        %1277 = vmatpush1.bf16.msra.mxu0 %v1190
        %1278 = vmatprep.subr.bf16.mxu0 0
        %1279 = vmatpush2.bf16.msra.mxu0 0
        %1280 = vmatprep.subr.bf16.mxu0 0
        %1281 = vmatpush2.bf16.msra.mxu0 0
        %1282 = vmatprep.subr.bf16.mxu0 0
        %1283 = vmatpush2.bf16.msra.mxu0 0
        %1284 = vmatprep.subr.bf16.mxu0 0
        %1285 = vmatpush2.bf16.msra.mxu0 0
        %1286 = vmatprep.subr.bf16.mxu0 0
        %1287 = vmatpush2.bf16.msra.mxu0 0
        %1288 = vmatprep.subr.bf16.mxu0 0
        %1289 = vmatpush2.bf16.msra.mxu0 0
        %1290 = vmatprep.subr.bf16.mxu0 0
        %1291 = vmatpush2.bf16.msra.mxu0 0
        %1292 = vmatprep.subr.bf16.mxu0 0
        %1293 = vmatpush2.bf16.msra.mxu0 0
        %1294 = vmatprep.mubr.bf16.mxu0 0
        %1295 = vmatmul.mubr.bf16.gmra.mxu0 %v1220
        %v1296 = vpop.f32.mrf.mxu0
        %v1297 = vadd.f32 0.0, %v1296
        %v1298 = vpop.f32.mrf.mxu0
        %v1299 = vadd.f32 0.0, %v1298
        %v1300 = vpop.f32.mrf.mxu0
        %v1301 = vpop.f32.mrf.mxu0
        %1302 = vdwg.mxu0
        %1303 = vst [vmem:[%s275] sm:$0xff] %v1256
        %1304 = vst [vmem:[%s275 + $0x8] sm:$0xff] %v1258
        %1305 = vst [vmem:[%s275 + $0x10] sm:$0xff] %v1297
        %1306 = vst [vmem:[%s275 + $0x18] sm:$0xff] %v1299
        %s1307 = sand.u32 %s159, 1
        %s1308 = scalar_lea.sflag [#allocation4], %s1307
        %s1309 = sand.u32 %s159, 1
        %s1310 = smul.addr %s1309, 32
        %s1311 = scalar_lea.vmem [#allocation3], %s1310
        // Predicated region
        $region68: #{tpu_custom_call.1} parent=62 // pred_check
          %p1312 = pneg %p169
        $region69: #{tpu_custom_call.1} parent=62 // pred_check_branch
          %1314 = sbr.rel (%p1312) target = $region71
        $region70: #{tpu_custom_call.1} parent=62 // pred_region
          %s1315 = smul.u32 4, %s20
          %s1317 = ssub.s32 512, 512
          %1318 = vsyncadd %s1308, %s1317
          %s1319 = smul.addr %s1315, 128
          %s1320 = scalar_lea.hbm %s6, %s1319
          %s1322 = sshll.u32 %s1311, 4
          %s1323 = int_to_ptr.vmem [resolvable:$true] %s1322
          %1325 = dma.vmem_to_hbm [thread:$0]  %s1323, 512, %s1320, %s1308
        $region71: #{tpu_custom_call.1} parent=62 // pred_fallthru
          _
      $region63: #{tpu_custom_call.1} parent=5 // pred_fallthru
        _
      %p1326 = scmp.le.s32.totalorder 2, %s15
      // Predicated region
      $region72: #{tpu_custom_call.1} parent=5 // pred_check
        %p1327 = pneg %p1326
      $region73: #{tpu_custom_call.1} parent=5 // pred_check_branch
        %1329 = sbr.rel (%p1327) target = $region75
      $region74: #{tpu_custom_call.1} parent=5 // pred_region
        %s1330 = ssub.s32 %s15, 2
        // Predicated region
        $region76: #{tpu_custom_call.1} parent=74 // pred_check
          %p1331 = pneg %p175
        $region77: #{tpu_custom_call.1} parent=74 // pred_check_branch
          %1333 = sbr.rel (%p1331) target = $region79
        $region78: #{tpu_custom_call.1} parent=74 // pred_region
          %s1334 = sand.u32 %s160, 1
          %s1335 = scalar_lea.sflag [#allocation4], %s1334
          %s1336 = sand.u32 %s160, 1
          %s1337 = smul.addr %s1336, 32
          %s1338 = scalar_lea.vmem [#allocation3], %s1337
          %1339 = dma.done %s1335, 512
        $region79: #{tpu_custom_call.1} parent=74 // pred_fallthru
          _
      $region75: #{tpu_custom_call.1} parent=5 // pred_fallthru
        _
    $region6: #{tpu_custom_call.1} parent=1 // loop_footer
      %s19 = sadd.s32 1, %s15
    $region7: #{tpu_custom_call.1} parent=1 // loop_footer_branch
      %14 = sbr.rel target = $region3
    $region8: #{tpu_custom_call.1} parent=1 // loop_exit
      _
    %1340 = vsyncpa [#allocation4], 1
    %s1341 = scalar_lea.sflag [#allocation4], 1
    %1342 = vsyncpa %s1341, 1

</llo_original>
